<compile_context>
chip_gen: v6e
topology: v6e:2x2x1
jax: 0.10.0
libtpu: 0.0.40
codegen_flags: <defaults>
</compile_context>

<pallas_src>
import functools

import numpy as np
import jax
import jax.numpy as jnp
from jax import lax
from jax.experimental import pallas as pl
from jax.experimental.pallas import tpu as pltpu

BS = 4  # block_size (the module asserts it is 4)


def _round_up(v, m):
    return -(-v // m) * m


@functools.lru_cache(maxsize=None)
def _scoped_vmem_limit():
    """Generation-aware scoped-VMEM limit: ~3/4 of physical VMEM, <= 100 MiB.
    v5e/v6e (128 MiB) -> 96 MiB, v7x (64 MiB) -> 48 MiB, unknown -> 48 MiB."""
    phys = None
    try:
        phys = getattr(pltpu.get_tpu_info(), "vmem_capacity_bytes", None)
    except Exception:
        phys = None
    if not phys:
        phys = 64 * 1024 * 1024          # conservative: assume smallest (v7x)
    return max(32 << 20, min(int(phys) * 3 // 4, 100 << 20))


def _bw_selector(W):
    """(W, 4*Wo) 0/1 matrix: column bw*Wo + q picks input column 4q + bw."""
    Wo = W // BS
    S = np.zeros((W, BS * Wo), dtype=np.float32)
    q = np.arange(Wo)
    for bw in range(BS):
        S[BS * q + bw, bw * Wo + q] = 1.0
    return S


def _s2d_kernel(x_ref, s_ref, o_ref, *, tn, w, wo, exact_split):
    # x_ref : (TN, C*Ho, 4*W)     free view of NCHW; lane index = bh*W + w
    # s_ref : (W, 4*Wo) bf16      0/1 selector, S[4q + bw, bw*Wo + q] = 1
    # o_ref : (TN, 16, C*Ho, Wo)  output blocks, group g = bh*4 + bw
    def one_image(i, carry):
        s = s_ref[...]                                 # cheap VMEM reload per image
        for bh in range(BS):
            xb = x_ref[i, :, bh * w:(bh + 1) * w]      # (C*Ho, W) lane slice
            if exact_split:
                # Exact selection of f32 (or f16/int) values in 3 bf16 MXU
                # passes: x == h1 + h2 + h3 exactly, each product is x_part*1.
                xf = xb.astype(jnp.float32)
                h1 = xf.astype(jnp.bfloat16)
                r1 = xf - h1.astype(jnp.float32)
                h2 = r1.astype(jnp.bfloat16)
                r2 = r1 - h2.astype(jnp.float32)
                h3 = r2.astype(jnp.bfloat16)
                y = (jnp.dot(h1, s, preferred_element_type=jnp.float32)
                     + jnp.dot(h2, s, preferred_element_type=jnp.float32)
                     + jnp.dot(h3, s, preferred_element_type=jnp.float32))
            else:                                      # bf16: one exact MXU pass
                y = jnp.dot(xb, s, preferred_element_type=jnp.float32)
            y = y.astype(o_ref.dtype)                  # single cast -> packed stores
            for bw in range(BS):
                o_ref[i, BS * bh + bw, :, :] = y[:, bw * wo:(bw + 1) * wo]
        return carry

    # fori_loop (not Python unroll) bounds the live set across images.
    lax.fori_loop(0, tn, one_image, 0)


@jax.jit
def space_to_depth(x):
    """x: (N, C, H, W) -> (N, 16*C, H//4, W//4), matching the PyTorch module."""
    N, C, H, W = x.shape
    assert H % BS == 0 and W % BS == 0
    Ho, Wo = H // BS, W // BS
    item = x.dtype.itemsize

    # Free row-major view: no data movement outside the kernel.
    x2 = x.reshape(N, C * Ho, BS * W)
    sel = jnp.asarray(_bw_selector(W), dtype=jnp.bfloat16)   # 0/1 exact in bf16

    # ---- VMEM budget (padding + double-buffer aware) -> images per grid step.
    vmem_limit = _scoped_vmem_limit()
    rows_p = _round_up(C * Ho, 8)
    in_img = rows_p * _round_up(BS * W, 128) * item               # input block/img
    out_img = BS * BS * rows_p * _round_up(Wo, 128) * item        # lane-padded out
    per_img = 2 * (in_img + out_img)                              # double-buffered
    fixed = (2 * _round_up(W, 8) * _round_up(BS * Wo, 128) * 2    # selector (bf16)
             + 8 * rows_p * _round_up(BS * Wo, 128) * 4)          # y + split temps
    budget = vmem_limit - fixed - (6 << 20)                       # Mosaic headroom
    cap = int(max(1, min(budget // per_img, 16, N)))
    if N >= 2:
        cap = min(cap, max(1, N // 2))    # keep >= 2 grid steps (v7x megacore)

    # Prefer a divisor of N (no padding); pad the batch only if divisors are poor.
    if N % cap == 0:
        TN, pad = cap, 0
    else:
        best = max(t for t in range(1, cap + 1) if N % t == 0)
        if 2 * best >= cap:
            TN, pad = best, 0
        else:
            TN, pad = cap, (-N) % cap
    Np = N + pad
    if pad:
        x2 = jnp.pad(x2, ((0, pad), (0, 0), (0, 0)))

    exact_split = (x.dtype != jnp.bfloat16)
    passes = 3 if exact_split else 1
    kernel = functools.partial(_s2d_kernel, tn=TN, w=W, wo=Wo,
                               exact_split=exact_split)

    out = pl.pallas_call(
        kernel,
        out_shape=jax.ShapeDtypeStruct((Np, BS * BS, C * Ho, Wo), x.dtype),
        grid=(Np // TN,),
        in_specs=[
            pl.BlockSpec((TN, C * Ho, BS * W), lambda n: (n, 0, 0)),
            pl.BlockSpec((W, BS * Wo), lambda n: (0, 0)),   # constant block
        ],
        out_specs=pl.BlockSpec((TN, BS * BS, C * Ho, Wo),
                               lambda n: (n, 0, 0, 0)),
        compiler_params=pltpu.CompilerParams(
            dimension_semantics=("parallel",),               # disjoint outputs
            vmem_limit_bytes=vmem_limit),
        cost_estimate=pl.CostEstimate(
            flops=passes * 2 * Np * BS * (C * Ho) * W * (BS * Wo),
            transcendentals=0,
            bytes_accessed=2 * Np * C * H * W * item + W * BS * Wo * 2),
    )(x2, sel)

    # Free row-major reshape: (Np, 16, C*Ho, Wo) -> (Np, 16*C, Ho, Wo);
    # channel order (bh, bw, c), exactly permute(0, 3, 5, 1, 2, 4).
    out = out.reshape(Np, BS * BS * C, Ho, Wo)
    return out[:N] if pad else out


def space_to_depth_ref(x):
    """Pure-JAX reference mirroring the PyTorch forward exactly."""
    N, C, H, W = x.shape
    y = x.reshape(N, C, H // BS, BS, W // BS, BS)
    y = jnp.transpose(y, (0, 3, 5, 1, 2, 4))
    return y.reshape(N, C * BS * BS, H // BS, W // BS)


if __name__ == "__main__":
    key = jax.random.PRNGKey(0)
    k0, k1, k2 = jax.random.split(key, 3)

    # Primary check: small aligned shape, f32, bit-exact (3-pass bf16 split).
    N, C, H, W = 2, 4, 16, 16
    x = jax.random.normal(k0, (N, C, H, W), dtype=jnp.float32)
    out = jax.block_until_ready(space_to_depth(x))
    ref = space_to_depth_ref(x)
    assert out.shape == (N, C * 16, H // 4, W // 4), out.shape
    np.testing.assert_array_equal(np.asarray(out), np.asarray(ref))

    # Unaligned shape: C*Ho not a multiple of 8, W not a multiple of 128
    # (exercises unaligned lane-slice / masked-store paths).
    x_odd = jax.random.normal(k1, (1, 3, 20, 24), dtype=jnp.float32)
    out_odd = jax.block_until_ready(space_to_depth(x_odd))
    np.testing.assert_array_equal(np.asarray(out_odd),
                                  np.asarray(space_to_depth_ref(x_odd)))

    # bf16 path: single exact MXU pass, bit-exact.
    x_bf = jax.random.normal(k2, (2, 4, 16, 16), dtype=jnp.bfloat16)
    out_bf = jax.block_until_ready(space_to_depth(x_bf))
    np.testing.assert_array_equal(np.asarray(out_bf),
                                  np.asarray(space_to_depth_ref(x_bf)))

    print("KERNEL_OK")
</pallas_src>

<mosaic_0001>
module attributes {stable_mosaic.version = 11 : i64} {
  func.func @_s2d_kernel(%arg0: i32, %arg1: memref<1x16x64xf32, #tpu.memory_space<vmem>>, %arg2: memref<16x16xbf16, #tpu.memory_space<vmem>>, %arg3: memref<1x16x16x4xf32, #tpu.memory_space<vmem>>) attributes {dimension_semantics = [#tpu.dimension_semantics<parallel>], iteration_bounds = array<i64: 2>, scalar_prefetch = 0 : i64, scratch_operands = 0 : i64, tpu.core_type = #tpu.core_type<tc>, window_params = [{transform_indices = @transform_0, window_bounds = array<i64: 1, 16, 64>}, {pipeline_mode = #tpu.pipeline_mode<synchronous>, transform_indices = @transform_1, window_bounds = array<i64: 16, 16>}, {transform_indices = @transform_2, window_bounds = array<i64: 1, 16, 16, 4>}]} {
    %c0_i32 = arith.constant 0 : i32
    %c0 = arith.constant 0 : index
    %c0_0 = arith.constant 0 : index
    %0 = vector.load %arg2[%c0, %c0_0] : memref<16x16xbf16, #tpu.memory_space<vmem>>, vector<16x16xbf16>
    %1 = arith.index_cast %c0_i32 : i32 to index
    %c0_1 = arith.constant 0 : index
    %c0_2 = arith.constant 0 : index
    %2 = vector.load %arg1[%1, %c0_1, %c0_2] : memref<1x16x64xf32, #tpu.memory_space<vmem>>, vector<1x16x16xf32>
    %3 = vector.shape_cast %2 : vector<1x16x16xf32> to vector<16x16xf32>
    %4 = arith.truncf %3 : vector<16x16xf32> to vector<16x16xbf16>
    %5 = arith.extf %4 : vector<16x16xbf16> to vector<16x16xf32>
    %6 = arith.subf %3, %5 : vector<16x16xf32>
    %7 = arith.truncf %6 : vector<16x16xf32> to vector<16x16xbf16>
    %8 = arith.extf %7 : vector<16x16xbf16> to vector<16x16xf32>
    %9 = arith.subf %6, %8 : vector<16x16xf32>
    %10 = arith.truncf %9 : vector<16x16xf32> to vector<16x16xbf16>
    %cst = arith.constant dense<0.000000e+00> : vector<16x16xf32>
    %11 = tpu.matmul %4, %0, %cst {dimension_numbers = #tpu.dot_dimension_numbers<[1], [0], [0], [1], [0, 0, 1, 1], [], []>} : vector<16x16xbf16>, vector<16x16xbf16>, vector<16x16xf32> -> vector<16x16xf32>
    %cst_3 = arith.constant dense<0.000000e+00> : vector<16x16xf32>
    %12 = tpu.matmul %7, %0, %cst_3 {dimension_numbers = #tpu.dot_dimension_numbers<[1], [0], [0], [1], [0, 0, 1, 1], [], []>} : vector<16x16xbf16>, vector<16x16xbf16>, vector<16x16xf32> -> vector<16x16xf32>
    %13 = arith.addf %11, %12 : vector<16x16xf32>
    %cst_4 = arith.constant dense<0.000000e+00> : vector<16x16xf32>
    %14 = tpu.matmul %10, %0, %cst_4 {dimension_numbers = #tpu.dot_dimension_numbers<[1], [0], [0], [1], [0, 0, 1, 1], [], []>} : vector<16x16xbf16>, vector<16x16xbf16>, vector<16x16xf32> -> vector<16x16xf32>
    %15 = arith.addf %13, %14 : vector<16x16xf32>
    %16 = vector.extract_strided_slice %15 {offsets = [0, 0], sizes = [16, 4], strides = [1, 1]} : vector<16x16xf32> to vector<16x4xf32>
    %17 = arith.index_cast %c0_i32 : i32 to index
    %c0_5 = arith.constant 0 : index
    %c0_6 = arith.constant 0 : index
    %c0_7 = arith.constant 0 : index
    %18 = vector.load %arg3[%17, %c0_5, %c0_6, %c0_7] : memref<1x16x16x4xf32, #tpu.memory_space<vmem>>, vector<1x1x16x4xf32>
    %19 = vector.shape_cast %18 : vector<1x1x16x4xf32> to vector<16x4xf32>
    %20 = vector.shape_cast %16 : vector<16x4xf32> to vector<1x1x16x4xf32>
    tpu.vector_store %arg3[%17, %c0_5, %c0_6, %c0_7], %20 {strides = array<i32>} : memref<1x16x16x4xf32, #tpu.memory_space<vmem>>, vector<1x1x16x4xf32>,
    %21 = vector.extract_strided_slice %15 {offsets = [0, 4], sizes = [16, 4], strides = [1, 1]} : vector<16x16xf32> to vector<16x4xf32>
    %22 = arith.index_cast %c0_i32 : i32 to index
    %c1 = arith.constant 1 : index
    %c0_8 = arith.constant 0 : index
    %c0_9 = arith.constant 0 : index
    %23 = vector.load %arg3[%22, %c1, %c0_8, %c0_9] : memref<1x16x16x4xf32, #tpu.memory_space<vmem>>, vector<1x1x16x4xf32>
    %24 = vector.shape_cast %23 : vector<1x1x16x4xf32> to vector<16x4xf32>
    %25 = vector.shape_cast %21 : vector<16x4xf32> to vector<1x1x16x4xf32>
    tpu.vector_store %arg3[%22, %c1, %c0_8, %c0_9], %25 {strides = array<i32>} : memref<1x16x16x4xf32, #tpu.memory_space<vmem>>, vector<1x1x16x4xf32>,
    %26 = vector.extract_strided_slice %15 {offsets = [0, 8], sizes = [16, 4], strides = [1, 1]} : vector<16x16xf32> to vector<16x4xf32>
    %27 = arith.index_cast %c0_i32 : i32 to index
    %c2 = arith.constant 2 : index
    %c0_10 = arith.constant 0 : index
    %c0_11 = arith.constant 0 : index
    %28 = vector.load %arg3[%27, %c2, %c0_10, %c0_11] : memref<1x16x16x4xf32, #tpu.memory_space<vmem>>, vector<1x1x16x4xf32>
    %29 = vector.shape_cast %28 : vector<1x1x16x4xf32> to vector<16x4xf32>
    %30 = vector.shape_cast %26 : vector<16x4xf32> to vector<1x1x16x4xf32>
    tpu.vector_store %arg3[%27, %c2, %c0_10, %c0_11], %30 {strides = array<i32>} : memref<1x16x16x4xf32, #tpu.memory_space<vmem>>, vector<1x1x16x4xf32>,
    %31 = vector.extract_strided_slice %15 {offsets = [0, 12], sizes = [16, 4], strides = [1, 1]} : vector<16x16xf32> to vector<16x4xf32>
    %32 = arith.index_cast %c0_i32 : i32 to index
    %c3 = arith.constant 3 : index
    %c0_12 = arith.constant 0 : index
    %c0_13 = arith.constant 0 : index
    %33 = vector.load %arg3[%32, %c3, %c0_12, %c0_13] : memref<1x16x16x4xf32, #tpu.memory_space<vmem>>, vector<1x1x16x4xf32>
    %34 = vector.shape_cast %33 : vector<1x1x16x4xf32> to vector<16x4xf32>
    %35 = vector.shape_cast %31 : vector<16x4xf32> to vector<1x1x16x4xf32>
    tpu.vector_store %arg3[%32, %c3, %c0_12, %c0_13], %35 {strides = array<i32>} : memref<1x16x16x4xf32, #tpu.memory_space<vmem>>, vector<1x1x16x4xf32>,
    %36 = arith.index_cast %c0_i32 : i32 to index
    %c0_14 = arith.constant 0 : index
    %c16 = arith.constant 16 : index
    %37 = vector.load %arg1[%36, %c0_14, %c16] : memref<1x16x64xf32, #tpu.memory_space<vmem>>, vector<1x16x16xf32>
    %38 = vector.shape_cast %37 : vector<1x16x16xf32> to vector<16x16xf32>
    %39 = arith.truncf %38 : vector<16x16xf32> to vector<16x16xbf16>
    %40 = arith.extf %39 : vector<16x16xbf16> to vector<16x16xf32>
    %41 = arith.subf %38, %40 : vector<16x16xf32>
    %42 = arith.truncf %41 : vector<16x16xf32> to vector<16x16xbf16>
    %43 = arith.extf %42 : vector<16x16xbf16> to vector<16x16xf32>
    %44 = arith.subf %41, %43 : vector<16x16xf32>
    %45 = arith.truncf %44 : vector<16x16xf32> to vector<16x16xbf16>
    %cst_15 = arith.constant dense<0.000000e+00> : vector<16x16xf32>
    %46 = tpu.matmul %39, %0, %cst_15 {dimension_numbers = #tpu.dot_dimension_numbers<[1], [0], [0], [1], [0, 0, 1, 1], [], []>} : vector<16x16xbf16>, vector<16x16xbf16>, vector<16x16xf32> -> vector<16x16xf32>
    %cst_16 = arith.constant dense<0.000000e+00> : vector<16x16xf32>
    %47 = tpu.matmul %42, %0, %cst_16 {dimension_numbers = #tpu.dot_dimension_numbers<[1], [0], [0], [1], [0, 0, 1, 1], [], []>} : vector<16x16xbf16>, vector<16x16xbf16>, vector<16x16xf32> -> vector<16x16xf32>
    %48 = arith.addf %46, %47 : vector<16x16xf32>
    %cst_17 = arith.constant dense<0.000000e+00> : vector<16x16xf32>
    %49 = tpu.matmul %45, %0, %cst_17 {dimension_numbers = #tpu.dot_dimension_numbers<[1], [0], [0], [1], [0, 0, 1, 1], [], []>} : vector<16x16xbf16>, vector<16x16xbf16>, vector<16x16xf32> -> vector<16x16xf32>
    %50 = arith.addf %48, %49 : vector<16x16xf32>
    %51 = vector.extract_strided_slice %50 {offsets = [0, 0], sizes = [16, 4], strides = [1, 1]} : vector<16x16xf32> to vector<16x4xf32>
    %52 = arith.index_cast %c0_i32 : i32 to index
    %c4 = arith.constant 4 : index
    %c0_18 = arith.constant 0 : index
    %c0_19 = arith.constant 0 : index
    %53 = vector.load %arg3[%52, %c4, %c0_18, %c0_19] : memref<1x16x16x4xf32, #tpu.memory_space<vmem>>, vector<1x1x16x4xf32>
    %54 = vector.shape_cast %53 : vector<1x1x16x4xf32> to vector<16x4xf32>
    %55 = vector.shape_cast %51 : vector<16x4xf32> to vector<1x1x16x4xf32>
    tpu.vector_store %arg3[%52, %c4, %c0_18, %c0_19], %55 {strides = array<i32>} : memref<1x16x16x4xf32, #tpu.memory_space<vmem>>, vector<1x1x16x4xf32>,
    %56 = vector.extract_strided_slice %50 {offsets = [0, 4], sizes = [16, 4], strides = [1, 1]} : vector<16x16xf32> to vector<16x4xf32>
    %57 = arith.index_cast %c0_i32 : i32 to index
    %c5 = arith.constant 5 : index
    %c0_20 = arith.constant 0 : index
    %c0_21 = arith.constant 0 : index
    %58 = vector.load %arg3[%57, %c5, %c0_20, %c0_21] : memref<1x16x16x4xf32, #tpu.memory_space<vmem>>, vector<1x1x16x4xf32>
    %59 = vector.shape_cast %58 : vector<1x1x16x4xf32> to vector<16x4xf32>
    %60 = vector.shape_cast %56 : vector<16x4xf32> to vector<1x1x16x4xf32>
    tpu.vector_store %arg3[%57, %c5, %c0_20, %c0_21], %60 {strides = array<i32>} : memref<1x16x16x4xf32, #tpu.memory_space<vmem>>, vector<1x1x16x4xf32>,
    %61 = vector.extract_strided_slice %50 {offsets = [0, 8], sizes = [16, 4], strides = [1, 1]} : vector<16x16xf32> to vector<16x4xf32>
    %62 = arith.index_cast %c0_i32 : i32 to index
    %c6 = arith.constant 6 : index
    %c0_22 = arith.constant 0 : index
    %c0_23 = arith.constant 0 : index
    %63 = vector.load %arg3[%62, %c6, %c0_22, %c0_23] : memref<1x16x16x4xf32, #tpu.memory_space<vmem>>, vector<1x1x16x4xf32>
    %64 = vector.shape_cast %63 : vector<1x1x16x4xf32> to vector<16x4xf32>
    %65 = vector.shape_cast %61 : vector<16x4xf32> to vector<1x1x16x4xf32>
    tpu.vector_store %arg3[%62, %c6, %c0_22, %c0_23], %65 {strides = array<i32>} : memref<1x16x16x4xf32, #tpu.memory_space<vmem>>, vector<1x1x16x4xf32>,
    %66 = vector.extract_strided_slice %50 {offsets = [0, 12], sizes = [16, 4], strides = [1, 1]} : vector<16x16xf32> to vector<16x4xf32>
    %67 = arith.index_cast %c0_i32 : i32 to index
    %c7 = arith.constant 7 : index
    %c0_24 = arith.constant 0 : index
    %c0_25 = arith.constant 0 : index
    %68 = vector.load %arg3[%67, %c7, %c0_24, %c0_25] : memref<1x16x16x4xf32, #tpu.memory_space<vmem>>, vector<1x1x16x4xf32>
    %69 = vector.shape_cast %68 : vector<1x1x16x4xf32> to vector<16x4xf32>
    %70 = vector.shape_cast %66 : vector<16x4xf32> to vector<1x1x16x4xf32>
    tpu.vector_store %arg3[%67, %c7, %c0_24, %c0_25], %70 {strides = array<i32>} : memref<1x16x16x4xf32, #tpu.memory_space<vmem>>, vector<1x1x16x4xf32>,
    %71 = arith.index_cast %c0_i32 : i32 to index
    %c0_26 = arith.constant 0 : index
    %c32 = arith.constant 32 : index
    %72 = vector.load %arg1[%71, %c0_26, %c32] : memref<1x16x64xf32, #tpu.memory_space<vmem>>, vector<1x16x16xf32>
    %73 = vector.shape_cast %72 : vector<1x16x16xf32> to vector<16x16xf32>
    %74 = arith.truncf %73 : vector<16x16xf32> to vector<16x16xbf16>
    %75 = arith.extf %74 : vector<16x16xbf16> to vector<16x16xf32>
    %76 = arith.subf %73, %75 : vector<16x16xf32>
    %77 = arith.truncf %76 : vector<16x16xf32> to vector<16x16xbf16>
    %78 = arith.extf %77 : vector<16x16xbf16> to vector<16x16xf32>
    %79 = arith.subf %76, %78 : vector<16x16xf32>
    %80 = arith.truncf %79 : vector<16x16xf32> to vector<16x16xbf16>
    %cst_27 = arith.constant dense<0.000000e+00> : vector<16x16xf32>
    %81 = tpu.matmul %74, %0, %cst_27 {dimension_numbers = #tpu.dot_dimension_numbers<[1], [0], [0], [1], [0, 0, 1, 1], [], []>} : vector<16x16xbf16>, vector<16x16xbf16>, vector<16x16xf32> -> vector<16x16xf32>
    %cst_28 = arith.constant dense<0.000000e+00> : vector<16x16xf32>
    %82 = tpu.matmul %77, %0, %cst_28 {dimension_numbers = #tpu.dot_dimension_numbers<[1], [0], [0], [1], [0, 0, 1, 1], [], []>} : vector<16x16xbf16>, vector<16x16xbf16>, vector<16x16xf32> -> vector<16x16xf32>
    %83 = arith.addf %81, %82 : vector<16x16xf32>
    %cst_29 = arith.constant dense<0.000000e+00> : vector<16x16xf32>
    %84 = tpu.matmul %80, %0, %cst_29 {dimension_numbers = #tpu.dot_dimension_numbers<[1], [0], [0], [1], [0, 0, 1, 1], [], []>} : vector<16x16xbf16>, vector<16x16xbf16>, vector<16x16xf32> -> vector<16x16xf32>
    %85 = arith.addf %83, %84 : vector<16x16xf32>
    %86 = vector.extract_strided_slice %85 {offsets = [0, 0], sizes = [16, 4], strides = [1, 1]} : vector<16x16xf32> to vector<16x4xf32>
    %87 = arith.index_cast %c0_i32 : i32 to index
    %c8 = arith.constant 8 : index
    %c0_30 = arith.constant 0 : index
    %c0_31 = arith.constant 0 : index
    %88 = vector.load %arg3[%87, %c8, %c0_30, %c0_31] : memref<1x16x16x4xf32, #tpu.memory_space<vmem>>, vector<1x1x16x4xf32>
    %89 = vector.shape_cast %88 : vector<1x1x16x4xf32> to vector<16x4xf32>
    %90 = vector.shape_cast %86 : vector<16x4xf32> to vector<1x1x16x4xf32>
    tpu.vector_store %arg3[%87, %c8, %c0_30, %c0_31], %90 {strides = array<i32>} : memref<1x16x16x4xf32, #tpu.memory_space<vmem>>, vector<1x1x16x4xf32>,
    %91 = vector.extract_strided_slice %85 {offsets = [0, 4], sizes = [16, 4], strides = [1, 1]} : vector<16x16xf32> to vector<16x4xf32>
    %92 = arith.index_cast %c0_i32 : i32 to index
    %c9 = arith.constant 9 : index
    %c0_32 = arith.constant 0 : index
    %c0_33 = arith.constant 0 : index
    %93 = vector.load %arg3[%92, %c9, %c0_32, %c0_33] : memref<1x16x16x4xf32, #tpu.memory_space<vmem>>, vector<1x1x16x4xf32>
    %94 = vector.shape_cast %93 : vector<1x1x16x4xf32> to vector<16x4xf32>
    %95 = vector.shape_cast %91 : vector<16x4xf32> to vector<1x1x16x4xf32>
    tpu.vector_store %arg3[%92, %c9, %c0_32, %c0_33], %95 {strides = array<i32>} : memref<1x16x16x4xf32, #tpu.memory_space<vmem>>, vector<1x1x16x4xf32>,
    %96 = vector.extract_strided_slice %85 {offsets = [0, 8], sizes = [16, 4], strides = [1, 1]} : vector<16x16xf32> to vector<16x4xf32>
    %97 = arith.index_cast %c0_i32 : i32 to index
    %c10 = arith.constant 10 : index
    %c0_34 = arith.constant 0 : index
    %c0_35 = arith.constant 0 : index
    %98 = vector.load %arg3[%97, %c10, %c0_34, %c0_35] : memref<1x16x16x4xf32, #tpu.memory_space<vmem>>, vector<1x1x16x4xf32>
    %99 = vector.shape_cast %98 : vector<1x1x16x4xf32> to vector<16x4xf32>
    %100 = vector.shape_cast %96 : vector<16x4xf32> to vector<1x1x16x4xf32>
    tpu.vector_store %arg3[%97, %c10, %c0_34, %c0_35], %100 {strides = array<i32>} : memref<1x16x16x4xf32, #tpu.memory_space<vmem>>, vector<1x1x16x4xf32>,
    %101 = vector.extract_strided_slice %85 {offsets = [0, 12], sizes = [16, 4], strides = [1, 1]} : vector<16x16xf32> to vector<16x4xf32>
    %102 = arith.index_cast %c0_i32 : i32 to index
    %c11 = arith.constant 11 : index
    %c0_36 = arith.constant 0 : index
    %c0_37 = arith.constant 0 : index
    %103 = vector.load %arg3[%102, %c11, %c0_36, %c0_37] : memref<1x16x16x4xf32, #tpu.memory_space<vmem>>, vector<1x1x16x4xf32>
    %104 = vector.shape_cast %103 : vector<1x1x16x4xf32> to vector<16x4xf32>
    %105 = vector.shape_cast %101 : vector<16x4xf32> to vector<1x1x16x4xf32>
    tpu.vector_store %arg3[%102, %c11, %c0_36, %c0_37], %105 {strides = array<i32>} : memref<1x16x16x4xf32, #tpu.memory_space<vmem>>, vector<1x1x16x4xf32>,
    %106 = arith.index_cast %c0_i32 : i32 to index
    %c0_38 = arith.constant 0 : index
    %c48 = arith.constant 48 : index
    %107 = vector.load %arg1[%106, %c0_38, %c48] : memref<1x16x64xf32, #tpu.memory_space<vmem>>, vector<1x16x16xf32>
    %108 = vector.shape_cast %107 : vector<1x16x16xf32> to vector<16x16xf32>
    %109 = arith.truncf %108 : vector<16x16xf32> to vector<16x16xbf16>
    %110 = arith.extf %109 : vector<16x16xbf16> to vector<16x16xf32>
    %111 = arith.subf %108, %110 : vector<16x16xf32>
    %112 = arith.truncf %111 : vector<16x16xf32> to vector<16x16xbf16>
    %113 = arith.extf %112 : vector<16x16xbf16> to vector<16x16xf32>
    %114 = arith.subf %111, %113 : vector<16x16xf32>
    %115 = arith.truncf %114 : vector<16x16xf32> to vector<16x16xbf16>
    %cst_39 = arith.constant dense<0.000000e+00> : vector<16x16xf32>
    %116 = tpu.matmul %109, %0, %cst_39 {dimension_numbers = #tpu.dot_dimension_numbers<[1], [0], [0], [1], [0, 0, 1, 1], [], []>} : vector<16x16xbf16>, vector<16x16xbf16>, vector<16x16xf32> -> vector<16x16xf32>
    %cst_40 = arith.constant dense<0.000000e+00> : vector<16x16xf32>
    %117 = tpu.matmul %112, %0, %cst_40 {dimension_numbers = #tpu.dot_dimension_numbers<[1], [0], [0], [1], [0, 0, 1, 1], [], []>} : vector<16x16xbf16>, vector<16x16xbf16>, vector<16x16xf32> -> vector<16x16xf32>
    %118 = arith.addf %116, %117 : vector<16x16xf32>
    %cst_41 = arith.constant dense<0.000000e+00> : vector<16x16xf32>
    %119 = tpu.matmul %115, %0, %cst_41 {dimension_numbers = #tpu.dot_dimension_numbers<[1], [0], [0], [1], [0, 0, 1, 1], [], []>} : vector<16x16xbf16>, vector<16x16xbf16>, vector<16x16xf32> -> vector<16x16xf32>
    %120 = arith.addf %118, %119 : vector<16x16xf32>
    %121 = vector.extract_strided_slice %120 {offsets = [0, 0], sizes = [16, 4], strides = [1, 1]} : vector<16x16xf32> to vector<16x4xf32>
    %122 = arith.index_cast %c0_i32 : i32 to index
    %c12 = arith.constant 12 : index
    %c0_42 = arith.constant 0 : index
    %c0_43 = arith.constant 0 : index
    %123 = vector.load %arg3[%122, %c12, %c0_42, %c0_43] : memref<1x16x16x4xf32, #tpu.memory_space<vmem>>, vector<1x1x16x4xf32>
    %124 = vector.shape_cast %123 : vector<1x1x16x4xf32> to vector<16x4xf32>
    %125 = vector.shape_cast %121 : vector<16x4xf32> to vector<1x1x16x4xf32>
    tpu.vector_store %arg3[%122, %c12, %c0_42, %c0_43], %125 {strides = array<i32>} : memref<1x16x16x4xf32, #tpu.memory_space<vmem>>, vector<1x1x16x4xf32>,
    %126 = vector.extract_strided_slice %120 {offsets = [0, 4], sizes = [16, 4], strides = [1, 1]} : vector<16x16xf32> to vector<16x4xf32>
    %127 = arith.index_cast %c0_i32 : i32 to index
    %c13 = arith.constant 13 : index
    %c0_44 = arith.constant 0 : index
    %c0_45 = arith.constant 0 : index
    %128 = vector.load %arg3[%127, %c13, %c0_44, %c0_45] : memref<1x16x16x4xf32, #tpu.memory_space<vmem>>, vector<1x1x16x4xf32>
    %129 = vector.shape_cast %128 : vector<1x1x16x4xf32> to vector<16x4xf32>
    %130 = vector.shape_cast %126 : vector<16x4xf32> to vector<1x1x16x4xf32>
    tpu.vector_store %arg3[%127, %c13, %c0_44, %c0_45], %130 {strides = array<i32>} : memref<1x16x16x4xf32, #tpu.memory_space<vmem>>, vector<1x1x16x4xf32>,
    %131 = vector.extract_strided_slice %120 {offsets = [0, 8], sizes = [16, 4], strides = [1, 1]} : vector<16x16xf32> to vector<16x4xf32>
    %132 = arith.index_cast %c0_i32 : i32 to index
    %c14 = arith.constant 14 : index
    %c0_46 = arith.constant 0 : index
    %c0_47 = arith.constant 0 : index
    %133 = vector.load %arg3[%132, %c14, %c0_46, %c0_47] : memref<1x16x16x4xf32, #tpu.memory_space<vmem>>, vector<1x1x16x4xf32>
    %134 = vector.shape_cast %133 : vector<1x1x16x4xf32> to vector<16x4xf32>
    %135 = vector.shape_cast %131 : vector<16x4xf32> to vector<1x1x16x4xf32>
    tpu.vector_store %arg3[%132, %c14, %c0_46, %c0_47], %135 {strides = array<i32>} : memref<1x16x16x4xf32, #tpu.memory_space<vmem>>, vector<1x1x16x4xf32>,
    %136 = vector.extract_strided_slice %120 {offsets = [0, 12], sizes = [16, 4], strides = [1, 1]} : vector<16x16xf32> to vector<16x4xf32>
    %137 = arith.index_cast %c0_i32 : i32 to index
    %c15 = arith.constant 15 : index
    %c0_48 = arith.constant 0 : index
    %c0_49 = arith.constant 0 : index
    %138 = vector.load %arg3[%137, %c15, %c0_48, %c0_49] : memref<1x16x16x4xf32, #tpu.memory_space<vmem>>, vector<1x1x16x4xf32>
    %139 = vector.shape_cast %138 : vector<1x1x16x4xf32> to vector<16x4xf32>
    %140 = vector.shape_cast %136 : vector<16x4xf32> to vector<1x1x16x4xf32>
    tpu.vector_store %arg3[%137, %c15, %c0_48, %c0_49], %140 {strides = array<i32>} : memref<1x16x16x4xf32, #tpu.memory_space<vmem>>, vector<1x1x16x4xf32>,
    %c1_i32 = arith.constant 1 : i32
    return
  }
  func.func @transform_0(%arg0: i32) -> (i32, i32, i32) {
    %c0_i32 = arith.constant 0 : i32
    %c0_i32_0 = arith.constant 0 : i32
    %c0_i32_1 = arith.constant 0 : i32
    return %arg0, %c0_i32, %c0_i32_0 : i32, i32, i32
  }
  func.func @transform_1(%arg0: i32) -> (i32, i32) {
    %c0_i32 = arith.constant 0 : i32
    %c0_i32_0 = arith.constant 0 : i32
    %c0_i32_1 = arith.constant 0 : i32
    return %c0_i32, %c0_i32_0 : i32, i32
  }
  func.func @transform_2(%arg0: i32) -> (i32, i32, i32, i32) {
    %c0_i32 = arith.constant 0 : i32
    %c0_i32_0 = arith.constant 0 : i32
    %c0_i32_1 = arith.constant 0 : i32
    %c0_i32_2 = arith.constant 0 : i32
    return %arg0, %c0_i32, %c0_i32_0, %c0_i32_1 : i32, i32, i32, i32
  }
}

</mosaic_0001>

<llo_original>
// kernel: space_to_depth.1
$region0: #{space_to_depth.1}
  #allocation0 [shape = 'u32[]', space=smem, size = 0x4, offset = 0x4, fixed_abs, tag = 'smem constant byte address 0x4 - core index']
  #allocation1 [shape = 'u32[144,128]{1,0:T(1,128)}', space=vmem, size = 0x12000, scoped, tag = 'internal scratch']
  %s0 = inlined_call_operand.vmem [shape: f32[2,16,64], index: 0, kind: input, shape index: {}]
  %s1 = inlined_call_operand.vmem [shape: bf16[16,16], index: 1, kind: input, shape index: {}]
  %s2 = inlined_call_operand.vmem [shape: f32[2,16,16,4], index: 2, kind: output, shape index: {}]
  %s3 = sld [smem:[#allocation0]]
  $region41: #{space_to_depth.1} parent=0
    _
  %s5 = ssub.s32 1, %s3
  %s6 = scalar_select 0, %s5, %s3
  loop: start=0, step=1, limit=4
  $region2: #{space_to_depth.1} parent=0 // loop_pre_header
    _
  $region3: #{space_to_depth.1} parent=0 // loop_header
    %s8 = sphi 0, %s12
    %p9 = scmp.ge.s32.totalorder %s8, 4
    %s18 = sphi 0, %s20
    %s21 = sphi 0, %s18
    %s22 = sphi 0, %s21
    %s38 = sphi 0, %s22
    %s42 = sphi 0, %s42
    %s44 = sphi 0, %s42
    %s45 = sphi 0, %s44
    %s59 = sphi 0, %s45
    %s65 = sphi 0, %s67
    %s68 = sphi 0, %s65
    %s69 = sphi 0, %s68
    %s85 = sphi 0, %s69
  $region4: #{space_to_depth.1} parent=0 // loop_header_branch
    %11 = sbr.rel (%p9) target = $region8
  $region5: #{space_to_depth.1} parent=0 // loop_body
    %s13 = ssub.s32 %s8, 1
    %s14 = ssub.s32 %s8, 2
    %s15 = sadd.s32 %s8, 1
    %s16 = ssub.s32 %s8, %s15
    %p17 = scmp.eq.s32.totalorder %s16, 0
    %s19 = sadd.s32 %s18, 1
    %s20 = scalar_select %p17, %s18, %s19
    %p23 = pneg %p17
    %p24 = scmp.eq.s32.totalorder %s8, 1
    %p25 = por %p23, %p24
    %p26 = scmp.ne.s32.totalorder %s18, %s21
    %p27 = scmp.eq.s32.totalorder %s8, 0
    %p28 = por %p26, %p27
    %p29 = scmp.ne.s32.totalorder %s18, %s21
    %p30 = scmp.eq.s32.totalorder %s13, 1
    %p31 = por %p29, %p30
    %p32 = scmp.ne.s32.totalorder %s21, %s22
    %p33 = scmp.eq.s32.totalorder %s13, 0
    %p34 = por %p32, %p33
    %p35 = scmp.ne.s32.totalorder %s21, %s22
    %p36 = scmp.eq.s32.totalorder %s14, 1
    %p37 = por %p35, %p36
    %p39 = scmp.ne.s32.totalorder %s22, %s38
    %p40 = scmp.eq.s32.totalorder %s14, 0
    %p41 = por %p39, %p40
    %s43 = sadd.s32 %s42, 1
    %p46 = scmp.eq.s32.totalorder %s8, 1
    %p47 = scmp.ne.s32.totalorder %s42, %s44
    %p48 = scmp.eq.s32.totalorder %s8, 0
    %p49 = por %p47, %p48
    %p50 = scmp.ne.s32.totalorder %s42, %s44
    %p51 = scmp.eq.s32.totalorder %s13, 1
    %p52 = por %p50, %p51
    %p53 = scmp.ne.s32.totalorder %s44, %s45
    %p54 = scmp.eq.s32.totalorder %s13, 0
    %p55 = por %p53, %p54
    %p56 = scmp.ne.s32.totalorder %s44, %s45
    %p57 = scmp.eq.s32.totalorder %s14, 1
    %p58 = por %p56, %p57
    %p60 = scmp.ne.s32.totalorder %s45, %s59
    %p61 = scmp.eq.s32.totalorder %s14, 0
    %p62 = por %p60, %p61
    %s63 = ssub.s32 %s8, %s15
    %p64 = scmp.eq.s32.totalorder %s63, 0
    %s66 = sadd.s32 %s65, 1
    %s67 = scalar_select %p64, %s65, %s66
    %p70 = pneg %p64
    %p71 = scmp.eq.s32.totalorder %s8, 1
    %p72 = por %p70, %p71
    %p73 = scmp.ne.s32.totalorder %s65, %s68
    %p74 = scmp.eq.s32.totalorder %s8, 0
    %p75 = por %p73, %p74
    %p76 = scmp.ne.s32.totalorder %s65, %s68
    %p77 = scmp.eq.s32.totalorder %s13, 1
    %p78 = por %p76, %p77
    %p79 = scmp.ne.s32.totalorder %s68, %s69
    %p80 = scmp.eq.s32.totalorder %s13, 0
    %p81 = por %p79, %p80
    %p82 = scmp.ne.s32.totalorder %s68, %s69
    %p83 = scmp.eq.s32.totalorder %s14, 1
    %p84 = por %p82, %p83
    %p86 = scmp.ne.s32.totalorder %s69, %s85
    %p87 = scmp.eq.s32.totalorder %s14, 0
    %p88 = por %p86, %p87
    %p89 = scmp.le.s32.totalorder 1, %s8
    %p90 = scmp.lt.s32.totalorder %s8, 3
    %p91 = pnand %p89, %p90
    %p92 = pneg %p91
    // Predicated region
    $region9: #{space_to_depth.1} parent=5 // pred_check
      _
    $region10: #{space_to_depth.1} parent=5 // pred_check_branch
      %94 = sbr.rel (%p91) target = $region12
    $region11: #{space_to_depth.1} parent=5 // pred_region
      %s95 = ssub.s32 %s8, 1
      // Predicated region
      $region13: #{space_to_depth.1} parent=11 // pred_check
        %p96 = pneg %p55
      $region14: #{space_to_depth.1} parent=11 // pred_check_branch
        %98 = sbr.rel (%p96) target = $region16
      $region15: #{space_to_depth.1} parent=11 // pred_region
        _
      $region16: #{space_to_depth.1} parent=11 // pred_fallthru
        _
    $region12: #{space_to_depth.1} parent=5 // pred_fallthru
      _
    %p99 = scmp.lt.s32.totalorder %s8, 2
    // Predicated region
    $region17: #{space_to_depth.1} parent=5 // pred_check
      %p100 = pneg %p99
    $region18: #{space_to_depth.1} parent=5 // pred_check_branch
      %102 = sbr.rel (%p100) target = $region20
    $region19: #{space_to_depth.1} parent=5 // pred_region
      // Predicated region
      $region21: #{space_to_depth.1} parent=19 // pred_check
        %p103 = pneg %p28
      $region22: #{space_to_depth.1} parent=19 // pred_check_branch
        %105 = sbr.rel (%p103) target = $region24
      $region23: #{space_to_depth.1} parent=19 // pred_region
        %p106 = scmp.lt.s32.totalorder %s8, 1
        %s107 = scalar_select %p106, %s8, 1
        %s108 = smul.addr %s107, 2
        %s109 = smul.addr %s108, 8
        %s110 = scalar_lea.vmem %s0, %s109
      $region24: #{space_to_depth.1} parent=19 // pred_fallthru
        _
    $region20: #{space_to_depth.1} parent=5 // pred_fallthru
      _
    %p111 = scmp.le.s32.totalorder 1, %s8
    %p112 = scmp.lt.s32.totalorder %s8, 3
    %p113 = pnand %p111, %p112
    %p114 = pneg %p113
    // Predicated region
    $region25: #{space_to_depth.1} parent=5 // pred_check
      _
    $region26: #{space_to_depth.1} parent=5 // pred_check_branch
      %116 = sbr.rel (%p113) target = $region28
    $region27: #{space_to_depth.1} parent=5 // pred_region
      %s117 = ssub.s32 %s8, 1
      %p118 = scmp.lt.s32.totalorder %s13, 1
      %s119 = scalar_select %p118, %s13, 1
      %s120 = smul.addr %s119, 2
      %s121 = smul.addr %s120, 8
      %s122 = scalar_lea.vmem %s0, %s121
      %p123 = pneg %p34
      %p124 = pneg %p31
      %p125 = pneg %p55
      %p126 = pneg %p52
      %p127 = pneg %p81
      %p128 = pneg %p78
      %p129 = scmp.lt.s32.totalorder %s13, 1
      %s130 = scalar_select %p129, %s13, 1
      %s131 = smul.addr %s130, 32
      %s132 = smul.addr %s131, 8
      %s133 = scalar_lea.vmem %s2, %s132
      %p134 = scmp.lt.s32.totalorder %s13, 1
      %s135 = scalar_select %p134, %s13, 1
      %s136 = smul.addr %s135, 2
      %s137 = smul.addr %s136, 8
      %s138 = scalar_lea.vmem %s0, %s137
      %p139 = scmp.lt.s32.totalorder %s13, 1
      %s140 = scalar_select %p139, %s13, 1
      %s141 = smul.addr %s140, 32
      %s142 = smul.addr %s141, 8
      %s143 = scalar_lea.vmem %s2, %s142
      %v145 = vld [vmem:[%s1] sm:$0xf]
      %v146 = vld [vmem:[%s1 + $0x4] sm:$0xf]
      %v147 = vld [vmem:[%s138] sm:$0xff]
      %v148 = vld [vmem:[%s138 + $0x8] sm:$0xff]
      %v149 = vpack.c.bf16 %v148, %v147
      %v150 = vunpack.c.l.bf16 %v149
      %v151 = vunpack.c.h.bf16 %v149
      %v152 = vsub.f32 %v147, %v150
      %v153 = vsub.f32 %v148, %v151
      %v154 = vpack.c.bf16 %v153, %v152
      %v155 = vunpack.c.l.bf16 %v154
      %v156 = vunpack.c.h.bf16 %v154
      %v157 = vsub.f32 %v152, %v155
      %v158 = vsub.f32 %v153, %v156
      %v159 = vpack.c.bf16 %v158, %v157
      %v162 = vunpack.c.l.b16 %v145
      %v163 = vunpack.c.l.b16 %v146
      %v164 = vpack.c.b16 %v163, %v162
      %vm166 = vcmask 130048
      %v168 = vsel %vm166, %v154, 0
      %170 = vmatprep.subr.bf16.mxu0 0
      %171 = vmatpush1.bf16.msra.mxu0 0
      %172 = vmatprep.subr.bf16.mxu0 0
      %173 = vmatpush1.bf16.msra.mxu0 0
      %174 = vmatprep.subr.bf16.mxu0 0
      %175 = vmatpush1.bf16.msra.mxu0 0
      %176 = vmatprep.subr.bf16.mxu0 0
      %177 = vmatpush1.bf16.msra.mxu0 0
      %178 = vmatprep.subr.bf16.mxu0 0
      %179 = vmatpush1.bf16.msra.mxu0 0
      %180 = vmatprep.subr.bf16.mxu0 0
      %181 = vmatpush1.bf16.msra.mxu0 0
      %182 = vmatprep.subr.bf16.mxu0 0
      %183 = vmatpush1.bf16.msra.mxu0 0
      %184 = vmatprep.subr.bf16.mxu0 0
      %185 = vmatpush1.bf16.msra.mxu0 %v164
      %186 = vmatprep.subr.bf16.mxu0 0
      %187 = vmatpush2.bf16.msra.mxu0 0
      %188 = vmatprep.subr.bf16.mxu0 0
      %189 = vmatpush2.bf16.msra.mxu0 0
      %190 = vmatprep.subr.bf16.mxu0 0
      %191 = vmatpush2.bf16.msra.mxu0 0
      %192 = vmatprep.subr.bf16.mxu0 0
      %193 = vmatpush2.bf16.msra.mxu0 0
      %194 = vmatprep.subr.bf16.mxu0 0
      %195 = vmatpush2.bf16.msra.mxu0 0
      %196 = vmatprep.subr.bf16.mxu0 0
      %197 = vmatpush2.bf16.msra.mxu0 0
      %198 = vmatprep.subr.bf16.mxu0 0
      %199 = vmatpush2.bf16.msra.mxu0 0
      %200 = vmatprep.subr.bf16.mxu0 0
      %201 = vmatpush2.bf16.msra.mxu0 0
      %202 = vmatprep.mubr.bf16.mxu0 0
      %203 = vmatmul.mubr.bf16.gmra.mxu0 %v168
      %v204 = vpop.f32.mrf.mxu0
      %v205 = vadd.f32 0.0, %v204
      %v206 = vpop.f32.mrf.mxu0
      %v207 = vpop.f32.mrf.mxu0
      %v208 = vadd.f32 0.0, %v207
      %v209 = vpop.f32.mrf.mxu0
      %210 = vdwg.mxu0
      %v212 = vsel %vm166, %v149, 0
      %214 = vmatprep.subr.bf16.mxu0 0
      %215 = vmatpush1.bf16.msra.mxu0 0
      %216 = vmatprep.subr.bf16.mxu0 0
      %217 = vmatpush1.bf16.msra.mxu0 0
      %218 = vmatprep.subr.bf16.mxu0 0
      %219 = vmatpush1.bf16.msra.mxu0 0
      %220 = vmatprep.subr.bf16.mxu0 0
      %221 = vmatpush1.bf16.msra.mxu0 0
      %222 = vmatprep.subr.bf16.mxu0 0
      %223 = vmatpush1.bf16.msra.mxu0 0
      %224 = vmatprep.subr.bf16.mxu0 0
      %225 = vmatpush1.bf16.msra.mxu0 0
      %226 = vmatprep.subr.bf16.mxu0 0
      %227 = vmatpush1.bf16.msra.mxu0 0
      %228 = vmatprep.subr.bf16.mxu0 0
      %229 = vmatpush1.bf16.msra.mxu0 %v164
      %230 = vmatprep.subr.bf16.mxu0 0
      %231 = vmatpush2.bf16.msra.mxu0 0
      %232 = vmatprep.subr.bf16.mxu0 0
      %233 = vmatpush2.bf16.msra.mxu0 0
      %234 = vmatprep.subr.bf16.mxu0 0
      %235 = vmatpush2.bf16.msra.mxu0 0
      %236 = vmatprep.subr.bf16.mxu0 0
      %237 = vmatpush2.bf16.msra.mxu0 0
      %238 = vmatprep.subr.bf16.mxu0 0
      %239 = vmatpush2.bf16.msra.mxu0 0
      %240 = vmatprep.subr.bf16.mxu0 0
      %241 = vmatpush2.bf16.msra.mxu0 0
      %242 = vmatprep.subr.bf16.mxu0 0
      %243 = vmatpush2.bf16.msra.mxu0 0
      %244 = vmatprep.subr.bf16.mxu0 0
      %245 = vmatpush2.bf16.msra.mxu0 0
      %246 = vmatprep.mubr.bf16.mxu0 0
      %247 = vmatmul.mubr.bf16.gmra.mxu0 %v212
      %v248 = vpop.f32.mrf.mxu0
      %v249 = vadd.f32 %v205, %v248
      %v250 = vpop.f32.mrf.mxu0
      %v251 = vpop.f32.mrf.mxu0
      %v252 = vadd.f32 %v208, %v251
      %v253 = vpop.f32.mrf.mxu0
      %254 = vdwg.mxu0
      %v256 = vsel %vm166, %v159, 0
      %258 = vmatprep.subr.bf16.mxu0 0
      %259 = vmatpush1.bf16.msra.mxu0 0
      %260 = vmatprep.subr.bf16.mxu0 0
      %261 = vmatpush1.bf16.msra.mxu0 0
      %262 = vmatprep.subr.bf16.mxu0 0
      %263 = vmatpush1.bf16.msra.mxu0 0
      %264 = vmatprep.subr.bf16.mxu0 0
      %265 = vmatpush1.bf16.msra.mxu0 0
      %266 = vmatprep.subr.bf16.mxu0 0
      %267 = vmatpush1.bf16.msra.mxu0 0
      %268 = vmatprep.subr.bf16.mxu0 0
      %269 = vmatpush1.bf16.msra.mxu0 0
      %270 = vmatprep.subr.bf16.mxu0 0
      %271 = vmatpush1.bf16.msra.mxu0 0
      %272 = vmatprep.subr.bf16.mxu0 0
      %273 = vmatpush1.bf16.msra.mxu0 %v164
      %274 = vmatprep.subr.bf16.mxu0 0
      %275 = vmatpush2.bf16.msra.mxu0 0
      %276 = vmatprep.subr.bf16.mxu0 0
      %277 = vmatpush2.bf16.msra.mxu0 0
      %278 = vmatprep.subr.bf16.mxu0 0
      %279 = vmatpush2.bf16.msra.mxu0 0
      %280 = vmatprep.subr.bf16.mxu0 0
      %281 = vmatpush2.bf16.msra.mxu0 0
      %282 = vmatprep.subr.bf16.mxu0 0
      %283 = vmatpush2.bf16.msra.mxu0 0
      %284 = vmatprep.subr.bf16.mxu0 0
      %285 = vmatpush2.bf16.msra.mxu0 0
      %286 = vmatprep.subr.bf16.mxu0 0
      %287 = vmatpush2.bf16.msra.mxu0 0
      %288 = vmatprep.subr.bf16.mxu0 0
      %289 = vmatpush2.bf16.msra.mxu0 0
      %290 = vmatprep.mubr.bf16.mxu0 0
      %291 = vmatmul.mubr.bf16.gmra.mxu0 %v256
      %v292 = vpop.f32.mrf.mxu0
      %v293 = vadd.f32 0.0, %v292
      %v294 = vpop.f32.mrf.mxu0
      %v295 = vpop.f32.mrf.mxu0
      %v296 = vadd.f32 0.0, %v295
      %v297 = vpop.f32.mrf.mxu0
      %298 = vdwg.mxu0
      %v299 = vadd.f32 %v249, %v293
      %v300 = vadd.f32 %v252, %v296
      %vm301 = vcmask 31744
      %302 = vst.msk [vmem:[%s143] sm:$0xff] %vm301, %v299
      %303 = vst.msk [vmem:[%s143 + $0x8] sm:$0xff] %vm301, %v300
      %306 = vrot.lane.b32.xlu0 %v299, 124
      %v307 = vpop.permute.xlu0 %306
      %308 = vrot.lane.b32.xlu0 %v300, 124
      %v309 = vpop.permute.xlu0 %308
      %s312 = scalar_lea.vmem %s143, 16
      %313 = vst.msk [vmem:[%s312] sm:$0xff] %vm301, %v307
      %314 = vst.msk [vmem:[%s312 + $0x8] sm:$0xff] %vm301, %v309
      %315 = vrot.lane.b32.xlu0 %v299, 120
      %v316 = vpop.permute.xlu0 %315
      %317 = vrot.lane.b32.xlu0 %v300, 120
      %v318 = vpop.permute.xlu0 %317
      %s321 = scalar_lea.vmem %s143, 32
      %322 = vst.msk [vmem:[%s321] sm:$0xff] %vm301, %v316
      %323 = vst.msk [vmem:[%s321 + $0x8] sm:$0xff] %vm301, %v318
      %324 = vrot.lane.b32.xlu0 %v299, 116
      %v325 = vpop.permute.xlu0 %324
      %326 = vrot.lane.b32.xlu0 %v300, 116
      %v327 = vpop.permute.xlu0 %326
      %s330 = scalar_lea.vmem %s143, 48
      %331 = vst.msk [vmem:[%s330] sm:$0xff] %vm301, %v325
      %332 = vst.msk [vmem:[%s330 + $0x8] sm:$0xff] %vm301, %v327
      %v333 = vld [vmem:[%s138] sm:$0xff]
      %v334 = vld [vmem:[%s138 + $0x8] sm:$0xff]
      %v335 = vpack.c.bf16 %v334, %v333
      %v336 = vunpack.c.l.bf16 %v335
      %v337 = vunpack.c.h.bf16 %v335
      %v338 = vsub.f32 %v333, %v336
      %v339 = vsub.f32 %v334, %v337
      %v340 = vpack.c.bf16 %v339, %v338
      %v341 = vunpack.c.l.bf16 %v340
      %v342 = vunpack.c.h.bf16 %v340
      %v343 = vsub.f32 %v338, %v341
      %v344 = vsub.f32 %v339, %v342
      %v345 = vpack.c.bf16 %v344, %v343
      %347 = vrot.lane.b32.xlu0 %v340, 112
      %v348 = vpop.permute.xlu0 %347
      %v350 = vsel %vm166, %v348, 0
      %352 = vmatprep.subr.bf16.mxu0 0
      %353 = vmatpush1.bf16.msra.mxu0 0
      %354 = vmatprep.subr.bf16.mxu0 0
      %355 = vmatpush1.bf16.msra.mxu0 0
      %356 = vmatprep.subr.bf16.mxu0 0
      %357 = vmatpush1.bf16.msra.mxu0 0
      %358 = vmatprep.subr.bf16.mxu0 0
      %359 = vmatpush1.bf16.msra.mxu0 0
      %360 = vmatprep.subr.bf16.mxu0 0
      %361 = vmatpush1.bf16.msra.mxu0 0
      %362 = vmatprep.subr.bf16.mxu0 0
      %363 = vmatpush1.bf16.msra.mxu0 0
      %364 = vmatprep.subr.bf16.mxu0 0
      %365 = vmatpush1.bf16.msra.mxu0 0
      %366 = vmatprep.subr.bf16.mxu0 0
      %367 = vmatpush1.bf16.msra.mxu0 %v164
      %368 = vmatprep.subr.bf16.mxu0 0
      %369 = vmatpush2.bf16.msra.mxu0 0
      %370 = vmatprep.subr.bf16.mxu0 0
      %371 = vmatpush2.bf16.msra.mxu0 0
      %372 = vmatprep.subr.bf16.mxu0 0
      %373 = vmatpush2.bf16.msra.mxu0 0
      %374 = vmatprep.subr.bf16.mxu0 0
      %375 = vmatpush2.bf16.msra.mxu0 0
      %376 = vmatprep.subr.bf16.mxu0 0
      %377 = vmatpush2.bf16.msra.mxu0 0
      %378 = vmatprep.subr.bf16.mxu0 0
      %379 = vmatpush2.bf16.msra.mxu0 0
      %380 = vmatprep.subr.bf16.mxu0 0
      %381 = vmatpush2.bf16.msra.mxu0 0
      %382 = vmatprep.subr.bf16.mxu0 0
      %383 = vmatpush2.bf16.msra.mxu0 0
      %384 = vmatprep.mubr.bf16.mxu0 0
      %385 = vmatmul.mubr.bf16.gmra.mxu0 %v350
      %v386 = vpop.f32.mrf.mxu0
      %v387 = vadd.f32 0.0, %v386
      %v388 = vpop.f32.mrf.mxu0
      %v389 = vpop.f32.mrf.mxu0
      %v390 = vadd.f32 0.0, %v389
      %v391 = vpop.f32.mrf.mxu0
      %392 = vdwg.mxu0
      %394 = vrot.lane.b32.xlu0 %v335, 112
      %v395 = vpop.permute.xlu0 %394
      %v397 = vsel %vm166, %v395, 0
      %399 = vmatprep.subr.bf16.mxu0 0
      %400 = vmatpush1.bf16.msra.mxu0 0
      %401 = vmatprep.subr.bf16.mxu0 0
      %402 = vmatpush1.bf16.msra.mxu0 0
      %403 = vmatprep.subr.bf16.mxu0 0
      %404 = vmatpush1.bf16.msra.mxu0 0
      %405 = vmatprep.subr.bf16.mxu0 0
      %406 = vmatpush1.bf16.msra.mxu0 0
      %407 = vmatprep.subr.bf16.mxu0 0
      %408 = vmatpush1.bf16.msra.mxu0 0
      %409 = vmatprep.subr.bf16.mxu0 0
      %410 = vmatpush1.bf16.msra.mxu0 0
      %411 = vmatprep.subr.bf16.mxu0 0
      %412 = vmatpush1.bf16.msra.mxu0 0
      %413 = vmatprep.subr.bf16.mxu0 0
      %414 = vmatpush1.bf16.msra.mxu0 %v164
      %415 = vmatprep.subr.bf16.mxu0 0
      %416 = vmatpush2.bf16.msra.mxu0 0
      %417 = vmatprep.subr.bf16.mxu0 0
      %418 = vmatpush2.bf16.msra.mxu0 0
      %419 = vmatprep.subr.bf16.mxu0 0
      %420 = vmatpush2.bf16.msra.mxu0 0
      %421 = vmatprep.subr.bf16.mxu0 0
      %422 = vmatpush2.bf16.msra.mxu0 0
      %423 = vmatprep.subr.bf16.mxu0 0
      %424 = vmatpush2.bf16.msra.mxu0 0
      %425 = vmatprep.subr.bf16.mxu0 0
      %426 = vmatpush2.bf16.msra.mxu0 0
      %427 = vmatprep.subr.bf16.mxu0 0
      %428 = vmatpush2.bf16.msra.mxu0 0
      %429 = vmatprep.subr.bf16.mxu0 0
      %430 = vmatpush2.bf16.msra.mxu0 0
      %431 = vmatprep.mubr.bf16.mxu0 0
      %432 = vmatmul.mubr.bf16.gmra.mxu0 %v397
      %v433 = vpop.f32.mrf.mxu0
      %v434 = vadd.f32 %v387, %v433
      %v435 = vpop.f32.mrf.mxu0
      %v436 = vpop.f32.mrf.mxu0
      %v437 = vadd.f32 %v390, %v436
      %v438 = vpop.f32.mrf.mxu0
      %439 = vdwg.mxu0
      %441 = vrot.lane.b32.xlu0 %v345, 112
      %v442 = vpop.permute.xlu0 %441
      %v444 = vsel %vm166, %v442, 0
      %446 = vmatprep.subr.bf16.mxu0 0
      %447 = vmatpush1.bf16.msra.mxu0 0
      %448 = vmatprep.subr.bf16.mxu0 0
      %449 = vmatpush1.bf16.msra.mxu0 0
      %450 = vmatprep.subr.bf16.mxu0 0
      %451 = vmatpush1.bf16.msra.mxu0 0
      %452 = vmatprep.subr.bf16.mxu0 0
      %453 = vmatpush1.bf16.msra.mxu0 0
      %454 = vmatprep.subr.bf16.mxu0 0
      %455 = vmatpush1.bf16.msra.mxu0 0
      %456 = vmatprep.subr.bf16.mxu0 0
      %457 = vmatpush1.bf16.msra.mxu0 0
      %458 = vmatprep.subr.bf16.mxu0 0
      %459 = vmatpush1.bf16.msra.mxu0 0
      %460 = vmatprep.subr.bf16.mxu0 0
      %461 = vmatpush1.bf16.msra.mxu0 %v164
      %462 = vmatprep.subr.bf16.mxu0 0
      %463 = vmatpush2.bf16.msra.mxu0 0
      %464 = vmatprep.subr.bf16.mxu0 0
      %465 = vmatpush2.bf16.msra.mxu0 0
      %466 = vmatprep.subr.bf16.mxu0 0
      %467 = vmatpush2.bf16.msra.mxu0 0
      %468 = vmatprep.subr.bf16.mxu0 0
      %469 = vmatpush2.bf16.msra.mxu0 0
      %470 = vmatprep.subr.bf16.mxu0 0
      %471 = vmatpush2.bf16.msra.mxu0 0
      %472 = vmatprep.subr.bf16.mxu0 0
      %473 = vmatpush2.bf16.msra.mxu0 0
      %474 = vmatprep.subr.bf16.mxu0 0
      %475 = vmatpush2.bf16.msra.mxu0 0
      %476 = vmatprep.subr.bf16.mxu0 0
      %477 = vmatpush2.bf16.msra.mxu0 0
      %478 = vmatprep.mubr.bf16.mxu0 0
      %479 = vmatmul.mubr.bf16.gmra.mxu0 %v444
      %v480 = vpop.f32.mrf.mxu0
      %v481 = vadd.f32 0.0, %v480
      %v482 = vpop.f32.mrf.mxu0
      %v483 = vpop.f32.mrf.mxu0
      %v484 = vadd.f32 0.0, %v483
      %v485 = vpop.f32.mrf.mxu0
      %486 = vdwg.mxu0
      %v487 = vadd.f32 %v434, %v481
      %v488 = vadd.f32 %v437, %v484
      %s489 = scalar_lea.vmem %s143, 64
      %490 = vst.msk [vmem:[%s489] sm:$0xff] %vm301, %v487
      %491 = vst.msk [vmem:[%s489 + $0x8] sm:$0xff] %vm301, %v488
      %494 = vrot.lane.b32.xlu0 %v487, 124
      %v495 = vpop.permute.xlu0 %494
      %496 = vrot.lane.b32.xlu0 %v488, 124
      %v497 = vpop.permute.xlu0 %496
      %s500 = scalar_lea.vmem %s143, 80
      %501 = vst.msk [vmem:[%s500] sm:$0xff] %vm301, %v495
      %502 = vst.msk [vmem:[%s500 + $0x8] sm:$0xff] %vm301, %v497
      %503 = vrot.lane.b32.xlu0 %v487, 120
      %v504 = vpop.permute.xlu0 %503
      %505 = vrot.lane.b32.xlu0 %v488, 120
      %v506 = vpop.permute.xlu0 %505
      %s509 = scalar_lea.vmem %s143, 96
      %510 = vst.msk [vmem:[%s509] sm:$0xff] %vm301, %v504
      %511 = vst.msk [vmem:[%s509 + $0x8] sm:$0xff] %vm301, %v506
      %512 = vrot.lane.b32.xlu0 %v487, 116
      %v513 = vpop.permute.xlu0 %512
      %514 = vrot.lane.b32.xlu0 %v488, 116
      %v515 = vpop.permute.xlu0 %514
      %s518 = scalar_lea.vmem %s143, 112
      %519 = vst.msk [vmem:[%s518] sm:$0xff] %vm301, %v513
      %520 = vst.msk [vmem:[%s518 + $0x8] sm:$0xff] %vm301, %v515
      %v521 = vld [vmem:[%s138] sm:$0xff]
      %v522 = vld [vmem:[%s138 + $0x8] sm:$0xff]
      %v523 = vpack.c.bf16 %v522, %v521
      %v524 = vunpack.c.l.bf16 %v523
      %v525 = vunpack.c.h.bf16 %v523
      %v526 = vsub.f32 %v521, %v524
      %v527 = vsub.f32 %v522, %v525
      %v528 = vpack.c.bf16 %v527, %v526
      %v529 = vunpack.c.l.bf16 %v528
      %v530 = vunpack.c.h.bf16 %v528
      %v531 = vsub.f32 %v526, %v529
      %v532 = vsub.f32 %v527, %v530
      %v533 = vpack.c.bf16 %v532, %v531
      %535 = vrot.lane.b32.xlu0 %v528, 96
      %v536 = vpop.permute.xlu0 %535
      %v538 = vsel %vm166, %v536, 0
      %540 = vmatprep.subr.bf16.mxu0 0
      %541 = vmatpush1.bf16.msra.mxu0 0
      %542 = vmatprep.subr.bf16.mxu0 0
      %543 = vmatpush1.bf16.msra.mxu0 0
      %544 = vmatprep.subr.bf16.mxu0 0
      %545 = vmatpush1.bf16.msra.mxu0 0
      %546 = vmatprep.subr.bf16.mxu0 0
      %547 = vmatpush1.bf16.msra.mxu0 0
      %548 = vmatprep.subr.bf16.mxu0 0
      %549 = vmatpush1.bf16.msra.mxu0 0
      %550 = vmatprep.subr.bf16.mxu0 0
      %551 = vmatpush1.bf16.msra.mxu0 0
      %552 = vmatprep.subr.bf16.mxu0 0
      %553 = vmatpush1.bf16.msra.mxu0 0
      %554 = vmatprep.subr.bf16.mxu0 0
      %555 = vmatpush1.bf16.msra.mxu0 %v164
      %556 = vmatprep.subr.bf16.mxu0 0
      %557 = vmatpush2.bf16.msra.mxu0 0
      %558 = vmatprep.subr.bf16.mxu0 0
      %559 = vmatpush2.bf16.msra.mxu0 0
      %560 = vmatprep.subr.bf16.mxu0 0
      %561 = vmatpush2.bf16.msra.mxu0 0
      %562 = vmatprep.subr.bf16.mxu0 0
      %563 = vmatpush2.bf16.msra.mxu0 0
      %564 = vmatprep.subr.bf16.mxu0 0
      %565 = vmatpush2.bf16.msra.mxu0 0
      %566 = vmatprep.subr.bf16.mxu0 0
      %567 = vmatpush2.bf16.msra.mxu0 0
      %568 = vmatprep.subr.bf16.mxu0 0
      %569 = vmatpush2.bf16.msra.mxu0 0
      %570 = vmatprep.subr.bf16.mxu0 0
      %571 = vmatpush2.bf16.msra.mxu0 0
      %572 = vmatprep.mubr.bf16.mxu0 0
      %573 = vmatmul.mubr.bf16.gmra.mxu0 %v538
      %v574 = vpop.f32.mrf.mxu0
      %v575 = vadd.f32 0.0, %v574
      %v576 = vpop.f32.mrf.mxu0
      %v577 = vpop.f32.mrf.mxu0
      %v578 = vadd.f32 0.0, %v577
      %v579 = vpop.f32.mrf.mxu0
      %580 = vdwg.mxu0
      %582 = vrot.lane.b32.xlu0 %v523, 96
      %v583 = vpop.permute.xlu0 %582
      %v585 = vsel %vm166, %v583, 0
      %587 = vmatprep.subr.bf16.mxu0 0
      %588 = vmatpush1.bf16.msra.mxu0 0
      %589 = vmatprep.subr.bf16.mxu0 0
      %590 = vmatpush1.bf16.msra.mxu0 0
      %591 = vmatprep.subr.bf16.mxu0 0
      %592 = vmatpush1.bf16.msra.mxu0 0
      %593 = vmatprep.subr.bf16.mxu0 0
      %594 = vmatpush1.bf16.msra.mxu0 0
      %595 = vmatprep.subr.bf16.mxu0 0
      %596 = vmatpush1.bf16.msra.mxu0 0
      %597 = vmatprep.subr.bf16.mxu0 0
      %598 = vmatpush1.bf16.msra.mxu0 0
      %599 = vmatprep.subr.bf16.mxu0 0
      %600 = vmatpush1.bf16.msra.mxu0 0
      %601 = vmatprep.subr.bf16.mxu0 0
      %602 = vmatpush1.bf16.msra.mxu0 %v164
      %603 = vmatprep.subr.bf16.mxu0 0
      %604 = vmatpush2.bf16.msra.mxu0 0
      %605 = vmatprep.subr.bf16.mxu0 0
      %606 = vmatpush2.bf16.msra.mxu0 0
      %607 = vmatprep.subr.bf16.mxu0 0
      %608 = vmatpush2.bf16.msra.mxu0 0
      %609 = vmatprep.subr.bf16.mxu0 0
      %610 = vmatpush2.bf16.msra.mxu0 0
      %611 = vmatprep.subr.bf16.mxu0 0
      %612 = vmatpush2.bf16.msra.mxu0 0
      %613 = vmatprep.subr.bf16.mxu0 0
      %614 = vmatpush2.bf16.msra.mxu0 0
      %615 = vmatprep.subr.bf16.mxu0 0
      %616 = vmatpush2.bf16.msra.mxu0 0
      %617 = vmatprep.subr.bf16.mxu0 0
      %618 = vmatpush2.bf16.msra.mxu0 0
      %619 = vmatprep.mubr.bf16.mxu0 0
      %620 = vmatmul.mubr.bf16.gmra.mxu0 %v585
      %v621 = vpop.f32.mrf.mxu0
      %v622 = vadd.f32 %v575, %v621
      %v623 = vpop.f32.mrf.mxu0
      %v624 = vpop.f32.mrf.mxu0
      %v625 = vadd.f32 %v578, %v624
      %v626 = vpop.f32.mrf.mxu0
      %627 = vdwg.mxu0
      %629 = vrot.lane.b32.xlu0 %v533, 96
      %v630 = vpop.permute.xlu0 %629
      %v632 = vsel %vm166, %v630, 0
      %634 = vmatprep.subr.bf16.mxu0 0
      %635 = vmatpush1.bf16.msra.mxu0 0
      %636 = vmatprep.subr.bf16.mxu0 0
      %637 = vmatpush1.bf16.msra.mxu0 0
      %638 = vmatprep.subr.bf16.mxu0 0
      %639 = vmatpush1.bf16.msra.mxu0 0
      %640 = vmatprep.subr.bf16.mxu0 0
      %641 = vmatpush1.bf16.msra.mxu0 0
      %642 = vmatprep.subr.bf16.mxu0 0
      %643 = vmatpush1.bf16.msra.mxu0 0
      %644 = vmatprep.subr.bf16.mxu0 0
      %645 = vmatpush1.bf16.msra.mxu0 0
      %646 = vmatprep.subr.bf16.mxu0 0
      %647 = vmatpush1.bf16.msra.mxu0 0
      %648 = vmatprep.subr.bf16.mxu0 0
      %649 = vmatpush1.bf16.msra.mxu0 %v164
      %650 = vmatprep.subr.bf16.mxu0 0
      %651 = vmatpush2.bf16.msra.mxu0 0
      %652 = vmatprep.subr.bf16.mxu0 0
      %653 = vmatpush2.bf16.msra.mxu0 0
      %654 = vmatprep.subr.bf16.mxu0 0
      %655 = vmatpush2.bf16.msra.mxu0 0
      %656 = vmatprep.subr.bf16.mxu0 0
      %657 = vmatpush2.bf16.msra.mxu0 0
      %658 = vmatprep.subr.bf16.mxu0 0
      %659 = vmatpush2.bf16.msra.mxu0 0
      %660 = vmatprep.subr.bf16.mxu0 0
      %661 = vmatpush2.bf16.msra.mxu0 0
      %662 = vmatprep.subr.bf16.mxu0 0
      %663 = vmatpush2.bf16.msra.mxu0 0
      %664 = vmatprep.subr.bf16.mxu0 0
      %665 = vmatpush2.bf16.msra.mxu0 0
      %666 = vmatprep.mubr.bf16.mxu0 0
      %667 = vmatmul.mubr.bf16.gmra.mxu0 %v632
      %v668 = vpop.f32.mrf.mxu0
      %v669 = vadd.f32 0.0, %v668
      %v670 = vpop.f32.mrf.mxu0
      %v671 = vpop.f32.mrf.mxu0
      %v672 = vadd.f32 0.0, %v671
      %v673 = vpop.f32.mrf.mxu0
      %674 = vdwg.mxu0
      %v675 = vadd.f32 %v622, %v669
      %v676 = vadd.f32 %v625, %v672
      %s677 = scalar_lea.vmem %s143, 128
      %678 = vst.msk [vmem:[%s677] sm:$0xff] %vm301, %v675
      %679 = vst.msk [vmem:[%s677 + $0x8] sm:$0xff] %vm301, %v676
      %682 = vrot.lane.b32.xlu0 %v675, 124
      %v683 = vpop.permute.xlu0 %682
      %684 = vrot.lane.b32.xlu0 %v676, 124
      %v685 = vpop.permute.xlu0 %684
      %s688 = scalar_lea.vmem %s143, 144
      %689 = vst.msk [vmem:[%s688] sm:$0xff] %vm301, %v683
      %690 = vst.msk [vmem:[%s688 + $0x8] sm:$0xff] %vm301, %v685
      %691 = vrot.lane.b32.xlu0 %v675, 120
      %v692 = vpop.permute.xlu0 %691
      %693 = vrot.lane.b32.xlu0 %v676, 120
      %v694 = vpop.permute.xlu0 %693
      %s697 = scalar_lea.vmem %s143, 160
      %698 = vst.msk [vmem:[%s697] sm:$0xff] %vm301, %v692
      %699 = vst.msk [vmem:[%s697 + $0x8] sm:$0xff] %vm301, %v694
      %700 = vrot.lane.b32.xlu0 %v675, 116
      %v701 = vpop.permute.xlu0 %700
      %702 = vrot.lane.b32.xlu0 %v676, 116
      %v703 = vpop.permute.xlu0 %702
      %s706 = scalar_lea.vmem %s143, 176
      %707 = vst.msk [vmem:[%s706] sm:$0xff] %vm301, %v701
      %708 = vst.msk [vmem:[%s706 + $0x8] sm:$0xff] %vm301, %v703
      %v709 = vld [vmem:[%s138] sm:$0xff]
      %v710 = vld [vmem:[%s138 + $0x8] sm:$0xff]
      %v711 = vpack.c.bf16 %v710, %v709
      %v712 = vunpack.c.l.bf16 %v711
      %v713 = vunpack.c.h.bf16 %v711
      %v714 = vsub.f32 %v709, %v712
      %v715 = vsub.f32 %v710, %v713
      %v716 = vpack.c.bf16 %v715, %v714
      %v717 = vunpack.c.l.bf16 %v716
      %v718 = vunpack.c.h.bf16 %v716
      %v719 = vsub.f32 %v714, %v717
      %v720 = vsub.f32 %v715, %v718
      %v721 = vpack.c.bf16 %v720, %v719
      %723 = vrot.lane.b32.xlu0 %v716, 80
      %v724 = vpop.permute.xlu0 %723
      %v726 = vsel %vm166, %v724, 0
      %728 = vmatprep.subr.bf16.mxu0 0
      %729 = vmatpush1.bf16.msra.mxu0 0
      %730 = vmatprep.subr.bf16.mxu0 0
      %731 = vmatpush1.bf16.msra.mxu0 0
      %732 = vmatprep.subr.bf16.mxu0 0
      %733 = vmatpush1.bf16.msra.mxu0 0
      %734 = vmatprep.subr.bf16.mxu0 0
      %735 = vmatpush1.bf16.msra.mxu0 0
      %736 = vmatprep.subr.bf16.mxu0 0
      %737 = vmatpush1.bf16.msra.mxu0 0
      %738 = vmatprep.subr.bf16.mxu0 0
      %739 = vmatpush1.bf16.msra.mxu0 0
      %740 = vmatprep.subr.bf16.mxu0 0
      %741 = vmatpush1.bf16.msra.mxu0 0
      %742 = vmatprep.subr.bf16.mxu0 0
      %743 = vmatpush1.bf16.msra.mxu0 %v164
      %744 = vmatprep.subr.bf16.mxu0 0
      %745 = vmatpush2.bf16.msra.mxu0 0
      %746 = vmatprep.subr.bf16.mxu0 0
      %747 = vmatpush2.bf16.msra.mxu0 0
      %748 = vmatprep.subr.bf16.mxu0 0
      %749 = vmatpush2.bf16.msra.mxu0 0
      %750 = vmatprep.subr.bf16.mxu0 0
      %751 = vmatpush2.bf16.msra.mxu0 0
      %752 = vmatprep.subr.bf16.mxu0 0
      %753 = vmatpush2.bf16.msra.mxu0 0
      %754 = vmatprep.subr.bf16.mxu0 0
      %755 = vmatpush2.bf16.msra.mxu0 0
      %756 = vmatprep.subr.bf16.mxu0 0
      %757 = vmatpush2.bf16.msra.mxu0 0
      %758 = vmatprep.subr.bf16.mxu0 0
      %759 = vmatpush2.bf16.msra.mxu0 0
      %760 = vmatprep.mubr.bf16.mxu0 0
      %761 = vmatmul.mubr.bf16.gmra.mxu0 %v726
      %v762 = vpop.f32.mrf.mxu0
      %v763 = vadd.f32 0.0, %v762
      %v764 = vpop.f32.mrf.mxu0
      %v765 = vpop.f32.mrf.mxu0
      %v766 = vadd.f32 0.0, %v765
      %v767 = vpop.f32.mrf.mxu0
      %768 = vdwg.mxu0
      %770 = vrot.lane.b32.xlu0 %v711, 80
      %v771 = vpop.permute.xlu0 %770
      %v773 = vsel %vm166, %v771, 0
      %775 = vmatprep.subr.bf16.mxu0 0
      %776 = vmatpush1.bf16.msra.mxu0 0
      %777 = vmatprep.subr.bf16.mxu0 0
      %778 = vmatpush1.bf16.msra.mxu0 0
      %779 = vmatprep.subr.bf16.mxu0 0
      %780 = vmatpush1.bf16.msra.mxu0 0
      %781 = vmatprep.subr.bf16.mxu0 0
      %782 = vmatpush1.bf16.msra.mxu0 0
      %783 = vmatprep.subr.bf16.mxu0 0
      %784 = vmatpush1.bf16.msra.mxu0 0
      %785 = vmatprep.subr.bf16.mxu0 0
      %786 = vmatpush1.bf16.msra.mxu0 0
      %787 = vmatprep.subr.bf16.mxu0 0
      %788 = vmatpush1.bf16.msra.mxu0 0
      %789 = vmatprep.subr.bf16.mxu0 0
      %790 = vmatpush1.bf16.msra.mxu0 %v164
      %791 = vmatprep.subr.bf16.mxu0 0
      %792 = vmatpush2.bf16.msra.mxu0 0
      %793 = vmatprep.subr.bf16.mxu0 0
      %794 = vmatpush2.bf16.msra.mxu0 0
      %795 = vmatprep.subr.bf16.mxu0 0
      %796 = vmatpush2.bf16.msra.mxu0 0
      %797 = vmatprep.subr.bf16.mxu0 0
      %798 = vmatpush2.bf16.msra.mxu0 0
      %799 = vmatprep.subr.bf16.mxu0 0
      %800 = vmatpush2.bf16.msra.mxu0 0
      %801 = vmatprep.subr.bf16.mxu0 0
      %802 = vmatpush2.bf16.msra.mxu0 0
      %803 = vmatprep.subr.bf16.mxu0 0
      %804 = vmatpush2.bf16.msra.mxu0 0
      %805 = vmatprep.subr.bf16.mxu0 0
      %806 = vmatpush2.bf16.msra.mxu0 0
      %807 = vmatprep.mubr.bf16.mxu0 0
      %808 = vmatmul.mubr.bf16.gmra.mxu0 %v773
      %v809 = vpop.f32.mrf.mxu0
      %v810 = vadd.f32 %v763, %v809
      %v811 = vpop.f32.mrf.mxu0
      %v812 = vpop.f32.mrf.mxu0
      %v813 = vadd.f32 %v766, %v812
      %v814 = vpop.f32.mrf.mxu0
      %815 = vdwg.mxu0
      %817 = vrot.lane.b32.xlu0 %v721, 80
      %v818 = vpop.permute.xlu0 %817
      %v820 = vsel %vm166, %v818, 0
      %822 = vmatprep.subr.bf16.mxu0 0
      %823 = vmatpush1.bf16.msra.mxu0 0
      %824 = vmatprep.subr.bf16.mxu0 0
      %825 = vmatpush1.bf16.msra.mxu0 0
      %826 = vmatprep.subr.bf16.mxu0 0
      %827 = vmatpush1.bf16.msra.mxu0 0
      %828 = vmatprep.subr.bf16.mxu0 0
      %829 = vmatpush1.bf16.msra.mxu0 0
      %830 = vmatprep.subr.bf16.mxu0 0
      %831 = vmatpush1.bf16.msra.mxu0 0
      %832 = vmatprep.subr.bf16.mxu0 0
      %833 = vmatpush1.bf16.msra.mxu0 0
      %834 = vmatprep.subr.bf16.mxu0 0
      %835 = vmatpush1.bf16.msra.mxu0 0
      %836 = vmatprep.subr.bf16.mxu0 0
      %837 = vmatpush1.bf16.msra.mxu0 %v164
      %838 = vmatprep.subr.bf16.mxu0 0
      %839 = vmatpush2.bf16.msra.mxu0 0
      %840 = vmatprep.subr.bf16.mxu0 0
      %841 = vmatpush2.bf16.msra.mxu0 0
      %842 = vmatprep.subr.bf16.mxu0 0
      %843 = vmatpush2.bf16.msra.mxu0 0
      %844 = vmatprep.subr.bf16.mxu0 0
      %845 = vmatpush2.bf16.msra.mxu0 0
      %846 = vmatprep.subr.bf16.mxu0 0
      %847 = vmatpush2.bf16.msra.mxu0 0
      %848 = vmatprep.subr.bf16.mxu0 0
      %849 = vmatpush2.bf16.msra.mxu0 0
      %850 = vmatprep.subr.bf16.mxu0 0
      %851 = vmatpush2.bf16.msra.mxu0 0
      %852 = vmatprep.subr.bf16.mxu0 0
      %853 = vmatpush2.bf16.msra.mxu0 0
      %854 = vmatprep.mubr.bf16.mxu0 0
      %855 = vmatmul.mubr.bf16.gmra.mxu0 %v820
      %v856 = vpop.f32.mrf.mxu0
      %v857 = vadd.f32 0.0, %v856
      %v858 = vpop.f32.mrf.mxu0
      %v859 = vpop.f32.mrf.mxu0
      %v860 = vadd.f32 0.0, %v859
      %v861 = vpop.f32.mrf.mxu0
      %862 = vdwg.mxu0
      %v863 = vadd.f32 %v810, %v857
      %v864 = vadd.f32 %v813, %v860
      %s865 = scalar_lea.vmem %s143, 192
      %866 = vst.msk [vmem:[%s865] sm:$0xff] %vm301, %v863
      %867 = vst.msk [vmem:[%s865 + $0x8] sm:$0xff] %vm301, %v864
      %870 = vrot.lane.b32.xlu0 %v863, 124
      %v871 = vpop.permute.xlu0 %870
      %872 = vrot.lane.b32.xlu0 %v864, 124
      %v873 = vpop.permute.xlu0 %872
      %s876 = scalar_lea.vmem %s143, 208
      %877 = vst.msk [vmem:[%s876] sm:$0xff] %vm301, %v871
      %878 = vst.msk [vmem:[%s876 + $0x8] sm:$0xff] %vm301, %v873
      %879 = vrot.lane.b32.xlu0 %v863, 120
      %v880 = vpop.permute.xlu0 %879
      %881 = vrot.lane.b32.xlu0 %v864, 120
      %v882 = vpop.permute.xlu0 %881
      %s885 = scalar_lea.vmem %s143, 224
      %886 = vst.msk [vmem:[%s885] sm:$0xff] %vm301, %v880
      %887 = vst.msk [vmem:[%s885 + $0x8] sm:$0xff] %vm301, %v882
      %888 = vrot.lane.b32.xlu0 %v863, 116
      %v889 = vpop.permute.xlu0 %888
      %890 = vrot.lane.b32.xlu0 %v864, 116
      %v891 = vpop.permute.xlu0 %890
      %s894 = scalar_lea.vmem %s143, 240
      %895 = vst.msk [vmem:[%s894] sm:$0xff] %vm301, %v889
      %896 = vst.msk [vmem:[%s894 + $0x8] sm:$0xff] %vm301, %v891
      %p897 = scmp.lt.s32.totalorder %s13, 1
      %s898 = scalar_select %p897, %s13, 1
      %s899 = smul.addr %s898, 32
      %s900 = smul.addr %s899, 8
      %s901 = scalar_lea.vmem %s2, %s900
      // Predicated region
      $region29: #{space_to_depth.1} parent=27 // pred_check
        %p902 = pneg %p78
      $region30: #{space_to_depth.1} parent=27 // pred_check_branch
        %904 = sbr.rel (%p902) target = $region32
      $region31: #{space_to_depth.1} parent=27 // pred_region
        _
      $region32: #{space_to_depth.1} parent=27 // pred_fallthru
        _
    $region28: #{space_to_depth.1} parent=5 // pred_fallthru
      _
    %p905 = scmp.le.s32.totalorder 2, %s8
    // Predicated region
    $region33: #{space_to_depth.1} parent=5 // pred_check
      %p906 = pneg %p905
    $region34: #{space_to_depth.1} parent=5 // pred_check_branch
      %908 = sbr.rel (%p906) target = $region36
    $region35: #{space_to_depth.1} parent=5 // pred_region
      %s909 = ssub.s32 %s8, 2
      // Predicated region
      $region37: #{space_to_depth.1} parent=35 // pred_check
        %p910 = pneg %p84
      $region38: #{space_to_depth.1} parent=35 // pred_check_branch
        %912 = sbr.rel (%p910) target = $region40
      $region39: #{space_to_depth.1} parent=35 // pred_region
        %p913 = scmp.lt.s32.totalorder %s14, 1
        %s914 = scalar_select %p913, %s14, 1
        %s915 = smul.addr %s914, 32
        %s916 = smul.addr %s915, 8
        %s917 = scalar_lea.vmem %s2, %s916
      $region40: #{space_to_depth.1} parent=35 // pred_fallthru
        _
    $region36: #{space_to_depth.1} parent=5 // pred_fallthru
      _
  $region6: #{space_to_depth.1} parent=0 // loop_footer
    %s12 = sadd.s32 1, %s8
  $region7: #{space_to_depth.1} parent=0 // loop_footer_branch
    %7 = sbr.rel target = $region3
  $region8: #{space_to_depth.1} parent=0 // loop_exit
    _

</llo_original>
